<compile_context>
chip_gen: v7x
topology: tpu7x:2x2x1
jax: 0.10.0
libtpu: 0.0.40
codegen_flags: <defaults>
</compile_context>

<pallas_src>
import functools

import jax
import jax.numpy as jnp
import numpy as np
from jax.experimental import pallas as pl
from jax.experimental.pallas import tpu as pltpu


def _mul_mask_kernel(x_ref, mask_ref, out_ref):
    # x block:   (1, ts, H) [batch_first]  or (ts, B, H) [seq_first]
    # mask block:(1, 1, H)                 or (1, B, H)
    # Pure VPU broadcast multiply; the kernel is HBM-bandwidth bound.
    out_ref[...] = x_ref[...] * mask_ref[...]


def _pick_seq_tile(seq_len, row_elems, itemsize, budget_bytes=2 << 20):
    """Largest seq tile whose x-block stays <= ~2 MiB (v7x-safe with double
    buffering), is sublane-aligned (multiple of 8) and divides seq_len."""
    max_ts = max(1, budget_bytes // max(1, row_elems * itemsize))
    if seq_len <= max_ts:
        return seq_len  # full seq fits -> single block along seq (full-dim block is always legal)
    ts = (min(seq_len, max_ts) // 8) * 8
    while ts >= 8:
        if seq_len % ts == 0:
            return ts
        ts -= 8
    return seq_len  # fallback: one block along seq


@functools.partial(jax.jit, static_argnames=("p", "batch_first", "training"))
def shared_dropout(x, key, *, p=0.5, batch_first=True, training=True):
    """Pallas implementation of SharedDropout.forward.

    x:   (batch, seq, hidden) if batch_first else (seq, batch, hidden)
    key: jax.random key used to draw the shared Bernoulli mask
    """
    if (not training) or p <= 0.0:
        return x

    if batch_first:
        B, S, H = x.shape
    else:
        S, B, H = x.shape

    # Shared mask: 0 or 1/(1-p), same values for every position along seq.
    keep = jax.random.bernoulli(key, 1.0 - p, (B, H))
    mask = keep.astype(x.dtype) * jnp.asarray(1.0 / (1.0 - p), x.dtype)

    itemsize = x.dtype.itemsize
    if batch_first:
        ts = _pick_seq_tile(S, H, itemsize)
        mask3 = mask[:, None, :]  # (B, 1, H)
        grid = (B, S // ts)
        in_specs = [
            pl.BlockSpec((1, ts, H), lambda b, s: (b, s, 0)),
            pl.BlockSpec((1, 1, H), lambda b, s: (b, 0, 0)),
        ]
        out_spec = pl.BlockSpec((1, ts, H), lambda b, s: (b, s, 0))
        dims = ("parallel", "parallel")
    else:
        ts = _pick_seq_tile(S, B * H, itemsize)
        mask3 = mask[None, :, :]  # (1, B, H)
        grid = (S // ts,)
        in_specs = [
            pl.BlockSpec((ts, B, H), lambda s: (s, 0, 0)),
            pl.BlockSpec((1, B, H), lambda s: (0, 0, 0)),
        ]
        out_spec = pl.BlockSpec((ts, B, H), lambda s: (s, 0, 0))
        dims = ("parallel",)

    return pl.pallas_call(
        _mul_mask_kernel,
        out_shape=jax.ShapeDtypeStruct(x.shape, x.dtype),
        grid=grid,
        in_specs=in_specs,
        out_specs=out_spec,
        compiler_params=pltpu.CompilerParams(dimension_semantics=dims),
    )(x, mask3)


if __name__ == "__main__":
    P = 0.5
    B, S, H = 2, 16, 128  # small, lane-dense (H multiple of 128)

    root = jax.random.PRNGKey(0)
    k_x, k_mask, k_mask2 = jax.random.split(root, 3)

    x = jax.random.normal(k_x, (B, S, H), dtype=jnp.float32)

    # ---- batch_first=True ----
    out = shared_dropout(x, k_mask, p=P, batch_first=True, training=True)
    out = jax.block_until_ready(out)

    keep = jax.random.bernoulli(k_mask, 1.0 - P, (B, H))
    ref_mask = keep.astype(jnp.float32) / (1.0 - P)
    ref = x * ref_mask[:, None, :]
    np.testing.assert_allclose(np.asarray(out), np.asarray(ref), rtol=1e-6, atol=1e-6)

    out_np = np.asarray(out)
    mask_np = np.asarray(ref_mask)
    # Mask has both kept and dropped entries, and dropped (b, h) columns are
    # zero for every position along the (shared) sequence axis.
    assert (mask_np == 0.0).any() and (mask_np == 1.0 / (1.0 - P)).any()
    dropped = np.broadcast_to((mask_np == 0.0)[:, None, :], (B, S, H))
    assert (out_np[dropped] == 0.0).all()

    # ---- batch_first=False ----
    x_sf = jnp.transpose(x, (1, 0, 2))  # (S, B, H)
    out_sf = shared_dropout(x_sf, k_mask2, p=P, batch_first=False, training=True)
    out_sf = jax.block_until_ready(out_sf)
    keep2 = jax.random.bernoulli(k_mask2, 1.0 - P, (B, H))
    ref_sf = x_sf * (keep2.astype(jnp.float32) / (1.0 - P))[None, :, :]
    np.testing.assert_allclose(np.asarray(out_sf), np.asarray(ref_sf), rtol=1e-6, atol=1e-6)

    # ---- eval mode: identity ----
    out_eval = shared_dropout(x, k_mask, p=P, batch_first=True, training=False)
    np.testing.assert_array_equal(np.asarray(out_eval), np.asarray(x))

    print("KERNEL_OK")
</pallas_src>

<mosaic_0001>
module attributes {stable_mosaic.version = 11 : i64} {
  func.func @_mul_mask_kernel(%arg0: i32, %arg1: i32, %arg2: memref<1x16x128xf32, #tpu.memory_space<vmem>>, %arg3: memref<1x1x128xf32, #tpu.memory_space<vmem>>, %arg4: memref<1x16x128xf32, #tpu.memory_space<vmem>>) attributes {dimension_semantics = [#tpu.dimension_semantics<parallel>, #tpu.dimension_semantics<parallel>], iteration_bounds = array<i64: 2, 1>, scalar_prefetch = 0 : i64, scratch_operands = 0 : i64, tpu.core_type = #tpu.core_type<tc>, window_params = [{transform_indices = @transform_0, window_bounds = array<i64: 1, 16, 128>}, {transform_indices = @transform_1, window_bounds = array<i64: 1, 1, 128>}, {transform_indices = @transform_2, window_bounds = array<i64: 1, 16, 128>}]} {
    %c0 = arith.constant 0 : index
    %c0_0 = arith.constant 0 : index
    %c0_1 = arith.constant 0 : index
    %0 = vector.load %arg2[%c0, %c0_0, %c0_1] : memref<1x16x128xf32, #tpu.memory_space<vmem>>, vector<1x16x128xf32>
    %c0_2 = arith.constant 0 : index
    %c0_3 = arith.constant 0 : index
    %c0_4 = arith.constant 0 : index
    %1 = vector.load %arg3[%c0_2, %c0_3, %c0_4] : memref<1x1x128xf32, #tpu.memory_space<vmem>>, vector<1x1x128xf32>
    %2 = vector.broadcast %1 : vector<1x1x128xf32> to vector<1x16x128xf32>
    %3 = arith.mulf %0, %2 : vector<1x16x128xf32>
    %c0_5 = arith.constant 0 : index
    %c0_6 = arith.constant 0 : index
    %c0_7 = arith.constant 0 : index
    %4 = vector.load %arg4[%c0_5, %c0_6, %c0_7] : memref<1x16x128xf32, #tpu.memory_space<vmem>>, vector<1x16x128xf32>
    tpu.vector_store %arg4[%c0_5, %c0_6, %c0_7], %3 {strides = array<i32>} : memref<1x16x128xf32, #tpu.memory_space<vmem>>, vector<1x16x128xf32>,
    return
  }
  func.func @transform_0(%arg0: i32, %arg1: i32) -> (i32, i32, i32) {
    %c0_i32 = arith.constant 0 : i32
    %c0_i32_0 = arith.constant 0 : i32
    return %arg0, %arg1, %c0_i32 : i32, i32, i32
  }
  func.func @transform_1(%arg0: i32, %arg1: i32) -> (i32, i32, i32) {
    %c0_i32 = arith.constant 0 : i32
    %c0_i32_0 = arith.constant 0 : i32
    %c0_i32_1 = arith.constant 0 : i32
    return %arg0, %c0_i32, %c0_i32_0 : i32, i32, i32
  }
  func.func @transform_2(%arg0: i32, %arg1: i32) -> (i32, i32, i32) {
    %c0_i32 = arith.constant 0 : i32
    %c0_i32_0 = arith.constant 0 : i32
    return %arg0, %arg1, %c0_i32 : i32, i32, i32
  }
}

</mosaic_0001>

<llo_original>
// kernel: shared_dropout.1
$region0: #{shared_dropout.1}
  #allocation0 [shape = 'u32[]', space=smem, size = 0x4, offset = 0x4, fixed_abs, tag = 'smem constant byte address 0x4 - core index']
  #allocation1 [shape = 'u32[144,128]{1,0:T(1,128)}', space=vmem, size = 0x12000, scoped, tag = 'internal scratch']
  %s0 = inlined_call_operand.vmem [shape: f32[2,16,128], index: 0, kind: input, shape index: {}]
  %s1 = inlined_call_operand.vmem [shape: f32[2,1,128], index: 1, kind: input, shape index: {}]
  %s2 = inlined_call_operand.hbm [shape: f32[2,16,128], index: 2, kind: output, shape index: {}]
  %s3 = sld [smem:[#allocation0]]
  $region41: #{shared_dropout.1} parent=0
    _
  %s5 = ssub.s32 1, %s3
  %s6 = scalar_select 0, %s5, %s3
  $region1: #{shared_dropout.1} parent=0
    #allocation2 [shape = 'u8[16384]{0}', space=vmem, size = 0x4000, scoped, tag = 'output window, operand 0']
    #allocation3 [shape = 's32[2]{0}', space=sflag, size = 0x8, scoped, tag = 'scoped memory for shared_dropout.1']
    %7 = vsyncpa [#allocation3], 0
    %s8 = scalar_lea.sflag [#allocation3], 1
    %9 = vsyncpa %s8, 0
    loop: start=0, step=1, limit=4
    $region2: #{shared_dropout.1} parent=1 // loop_pre_header
      _
    $region3: #{shared_dropout.1} parent=1 // loop_header
      %s11 = sphi 0, %s15
      %p12 = scmp.ge.s32.totalorder %s11, 4
      %s18 = sphi 0, %s30
      %s19 = sphi 0, %s26
      %s20 = sphi 0, %s18
      %s21 = sphi 0, %s19
      %s22 = sphi 0, %s20
      %s23 = sphi 0, %s21
      %s35 = sphi 0, %s37
      %s38 = sphi 0, %s35
      %s39 = sphi 0, %s38
      %s55 = sphi 0, %s39
      %s61 = sphi 0, %s63
      %s64 = sphi 0, %s61
      %s65 = sphi 0, %s64
      %s81 = sphi 0, %s65
      %s89 = sphi 0, %s91
      %s92 = sphi 0, %s89
      %s93 = sphi 0, %s92
      %s109 = sphi 0, %s93
    $region4: #{shared_dropout.1} parent=1 // loop_header_branch
      %14 = sbr.rel (%p12) target = $region8
    $region5: #{shared_dropout.1} parent=1 // loop_body
      %s16 = ssub.s32 %s11, 1
      %s17 = ssub.s32 %s11, 2
      %s24 = sadd.s32 1, %s19
      %p25 = scmp.ge.s32.totalorder %s24, 1
      %s26 = scalar_select %p25, 0, %s24
      %s27 = sadd.s32 1, %s18
      %s28 = scalar_select %p25, %s27, %s18
      %p29 = scmp.ge.s32.totalorder %s28, 2
      %s30 = scalar_select %p29, 0, %s28
      %s31 = ssub.s32 %s18, %s30
      %s32 = ssub.s32 %s19, %s26
      %s33 = sor.u32 %s31, %s32
      %p34 = scmp.eq.s32.totalorder %s33, 0
      %s36 = sadd.s32 %s35, 1
      %s37 = scalar_select %p34, %s35, %s36
      %p40 = pneg %p34
      %p41 = scmp.eq.s32.totalorder %s11, 1
      %p42 = por %p40, %p41
      %p43 = scmp.ne.s32.totalorder %s35, %s38
      %p44 = scmp.eq.s32.totalorder %s11, 0
      %p45 = por %p43, %p44
      %p46 = scmp.ne.s32.totalorder %s35, %s38
      %p47 = scmp.eq.s32.totalorder %s16, 1
      %p48 = por %p46, %p47
      %p49 = scmp.ne.s32.totalorder %s38, %s39
      %p50 = scmp.eq.s32.totalorder %s16, 0
      %p51 = por %p49, %p50
      %p52 = scmp.ne.s32.totalorder %s38, %s39
      %p53 = scmp.eq.s32.totalorder %s17, 1
      %p54 = por %p52, %p53
      %p56 = scmp.ne.s32.totalorder %s39, %s55
      %p57 = scmp.eq.s32.totalorder %s17, 0
      %p58 = por %p56, %p57
      %s59 = ssub.s32 %s18, %s30
      %p60 = scmp.eq.s32.totalorder %s59, 0
      %s62 = sadd.s32 %s61, 1
      %s63 = scalar_select %p60, %s61, %s62
      %p66 = pneg %p60
      %p67 = scmp.eq.s32.totalorder %s11, 1
      %p68 = por %p66, %p67
      %p69 = scmp.ne.s32.totalorder %s61, %s64
      %p70 = scmp.eq.s32.totalorder %s11, 0
      %p71 = por %p69, %p70
      %p72 = scmp.ne.s32.totalorder %s61, %s64
      %p73 = scmp.eq.s32.totalorder %s16, 1
      %p74 = por %p72, %p73
      %p75 = scmp.ne.s32.totalorder %s64, %s65
      %p76 = scmp.eq.s32.totalorder %s16, 0
      %p77 = por %p75, %p76
      %p78 = scmp.ne.s32.totalorder %s64, %s65
      %p79 = scmp.eq.s32.totalorder %s17, 1
      %p80 = por %p78, %p79
      %p82 = scmp.ne.s32.totalorder %s65, %s81
      %p83 = scmp.eq.s32.totalorder %s17, 0
      %p84 = por %p82, %p83
      %s85 = ssub.s32 %s18, %s30
      %s86 = ssub.s32 %s19, %s26
      %s87 = sor.u32 %s85, %s86
      %p88 = scmp.eq.s32.totalorder %s87, 0
      %s90 = sadd.s32 %s89, 1
      %s91 = scalar_select %p88, %s89, %s90
      %p94 = pneg %p88
      %p95 = scmp.eq.s32.totalorder %s11, 1
      %p96 = por %p94, %p95
      %p97 = scmp.ne.s32.totalorder %s89, %s92
      %p98 = scmp.eq.s32.totalorder %s11, 0
      %p99 = por %p97, %p98
      %p100 = scmp.ne.s32.totalorder %s89, %s92
      %p101 = scmp.eq.s32.totalorder %s16, 1
      %p102 = por %p100, %p101
      %p103 = scmp.ne.s32.totalorder %s92, %s93
      %p104 = scmp.eq.s32.totalorder %s16, 0
      %p105 = por %p103, %p104
      %p106 = scmp.ne.s32.totalorder %s92, %s93
      %p107 = scmp.eq.s32.totalorder %s17, 1
      %p108 = por %p106, %p107
      %p110 = scmp.ne.s32.totalorder %s93, %s109
      %p111 = scmp.eq.s32.totalorder %s17, 0
      %p112 = por %p110, %p111
      %p113 = scmp.le.s32.totalorder 1, %s11
      %p114 = scmp.lt.s32.totalorder %s11, 3
      %p115 = pnand %p113, %p114
      %p116 = pneg %p115
      // Predicated region
      $region9: #{shared_dropout.1} parent=5 // pred_check
        _
      $region10: #{shared_dropout.1} parent=5 // pred_check_branch
        %118 = sbr.rel (%p115) target = $region12
      $region11: #{shared_dropout.1} parent=5 // pred_region
        %s119 = ssub.s32 %s11, 1
      $region12: #{shared_dropout.1} parent=5 // pred_fallthru
        _
      %p120 = scmp.lt.s32.totalorder %s11, 2
      // Predicated region
      $region13: #{shared_dropout.1} parent=5 // pred_check
        %p121 = pneg %p120
      $region14: #{shared_dropout.1} parent=5 // pred_check_branch
        %123 = sbr.rel (%p121) target = $region16
      $region15: #{shared_dropout.1} parent=5 // pred_region
        // Predicated region
        $region17: #{shared_dropout.1} parent=15 // pred_check
          %p124 = pneg %p45
        $region18: #{shared_dropout.1} parent=15 // pred_check_branch
          %126 = sbr.rel (%p124) target = $region20
        $region19: #{shared_dropout.1} parent=15 // pred_region
          %s127 = smul.u32 2, %s19
          %p128 = scmp.lt.s32.totalorder %s18, 1
          %s129 = scalar_select %p128, %s18, 1
          %p130 = scmp.lt.s32.totalorder %s127, 1
          %s131 = scalar_select %p130, %s127, 1
          %s132 = smul.addr %s129, 2
          %s133 = sadd.s32 %s131, %s132
          %s134 = smul.addr %s133, 8
          %s135 = scalar_lea.vmem %s0, %s134
          %s136 = smul.u32 2, %s19
        $region20: #{shared_dropout.1} parent=15 // pred_fallthru
          _
        // Predicated region
        $region21: #{shared_dropout.1} parent=15 // pred_check
          %p137 = pneg %p71
        $region22: #{shared_dropout.1} parent=15 // pred_check_branch
          %139 = sbr.rel (%p137) target = $region24
        $region23: #{shared_dropout.1} parent=15 // pred_region
          %p140 = scmp.lt.s32.totalorder %s18, 1
          %s141 = scalar_select %p140, %s18, 1
          %s142 = scalar_lea.vmem %s1, %s141
        $region24: #{shared_dropout.1} parent=15 // pred_fallthru
          _
      $region16: #{shared_dropout.1} parent=5 // pred_fallthru
        _
      %p143 = scmp.le.s32.totalorder 1, %s11
      %p144 = scmp.lt.s32.totalorder %s11, 3
      %p145 = pnand %p143, %p144
      %p146 = pneg %p145
      // Predicated region
      $region25: #{shared_dropout.1} parent=5 // pred_check
        _
      $region26: #{shared_dropout.1} parent=5 // pred_check_branch
        %148 = sbr.rel (%p145) target = $region28
      $region27: #{shared_dropout.1} parent=5 // pred_region
        %s149 = ssub.s32 %s11, 1
        %s150 = smul.u32 2, %s21
        %p151 = scmp.lt.s32.totalorder %s20, 1
        %s152 = scalar_select %p151, %s20, 1
        %p153 = scmp.lt.s32.totalorder %s150, 1
        %s154 = scalar_select %p153, %s150, 1
        %s155 = smul.addr %s152, 2
        %s156 = sadd.s32 %s154, %s155
        %s157 = smul.addr %s156, 8
        %s158 = scalar_lea.vmem %s0, %s157
        %p159 = pneg %p51
        %p160 = pneg %p48
        %p161 = scmp.lt.s32.totalorder %s20, 1
        %s162 = scalar_select %p161, %s20, 1
        %s163 = scalar_lea.vmem %s1, %s162
        %p164 = pneg %p77
        %p165 = pneg %p74
        %p166 = pneg %p105
        %p167 = pneg %p102
        %s168 = sand.u32 %s92, 1
        %s169 = scalar_lea.sflag [#allocation3], %s168
        %s170 = sand.u32 %s92, 1
        %s171 = smul.addr %s170, 16
        %s172 = scalar_lea.vmem [#allocation2], %s171
        %s173 = smul.u32 2, %s21
        %p174 = scmp.lt.s32.totalorder %s20, 1
        %s175 = scalar_select %p174, %s20, 1
        %p176 = scmp.lt.s32.totalorder %s173, 1
        %s177 = scalar_select %p176, %s173, 1
        %s178 = smul.addr %s175, 2
        %s179 = sadd.s32 %s177, %s178
        %s180 = smul.addr %s179, 8
        %s181 = scalar_lea.vmem %s0, %s180
        %s182 = smul.u32 2, %s21
        %p183 = scmp.lt.s32.totalorder %s20, 1
        %s184 = scalar_select %p183, %s20, 1
        %s185 = scalar_lea.vmem %s1, %s184
        %s186 = smul.u32 2, %s21
        %v187 = vld [vmem:[%s181] sm:$0xff]
        %v188 = vld [vmem:[%s181 + $0x8] sm:$0xff]
        %v189 = vld [vmem:[%s185] sm:$0x1]
        %v191 = vlaneseq
        %v192 = vshrl.u32 %v191, 7
        %v193 = vsub.s32 0, %v192
        %v194 = vrot.slane %v189, %v193
        %v196 = vmul.f32 %v187, %v194
        %v197 = vmul.f32 %v188, %v194
        %198 = vst [vmem:[%s172] sm:$0xff] %v196
        %199 = vst [vmem:[%s172 + $0x8] sm:$0xff] %v197
        %s200 = sand.u32 %s92, 1
        %s201 = scalar_lea.sflag [#allocation3], %s200
        %s202 = sand.u32 %s92, 1
        %s203 = smul.addr %s202, 16
        %s204 = scalar_lea.vmem [#allocation2], %s203
        // Predicated region
        $region29: #{shared_dropout.1} parent=27 // pred_check
          %p205 = pneg %p102
        $region30: #{shared_dropout.1} parent=27 // pred_check_branch
          %207 = sbr.rel (%p205) target = $region32
        $region31: #{shared_dropout.1} parent=27 // pred_region
          %s208 = smul.u32 2, %s21
          %s210 = ssub.s32 256, 256
          %211 = vsyncadd %s201, %s210
          %s212 = smul.addr %s20, 2
          %s213 = sadd.s32 %s208, %s212
          %s214 = smul.addr %s213, 128
          %s215 = scalar_lea.hbm %s2, %s214
          %s216 = sshll.u32 %s204, 4
          %s217 = int_to_ptr.vmem [resolvable:$true] %s216
          %222 = dma.vmem_to_hbm [thread:$0]  %s217, 256, %s215, %s201, 128, 128, 8
        $region32: #{shared_dropout.1} parent=27 // pred_fallthru
          _
      $region28: #{shared_dropout.1} parent=5 // pred_fallthru
        _
      %p223 = scmp.le.s32.totalorder 2, %s11
      // Predicated region
      $region33: #{shared_dropout.1} parent=5 // pred_check
        %p224 = pneg %p223
      $region34: #{shared_dropout.1} parent=5 // pred_check_branch
        %226 = sbr.rel (%p224) target = $region36
      $region35: #{shared_dropout.1} parent=5 // pred_region
        %s227 = ssub.s32 %s11, 2
        // Predicated region
        $region37: #{shared_dropout.1} parent=35 // pred_check
          %p228 = pneg %p108
        $region38: #{shared_dropout.1} parent=35 // pred_check_branch
          %230 = sbr.rel (%p228) target = $region40
        $region39: #{shared_dropout.1} parent=35 // pred_region
          %s231 = sand.u32 %s93, 1
          %s232 = scalar_lea.sflag [#allocation3], %s231
          %s233 = sand.u32 %s93, 1
          %s234 = smul.addr %s233, 16
          %s235 = scalar_lea.vmem [#allocation2], %s234
          %236 = dma.done %s232, 256
        $region40: #{shared_dropout.1} parent=35 // pred_fallthru
          _
      $region36: #{shared_dropout.1} parent=5 // pred_fallthru
        _
    $region6: #{shared_dropout.1} parent=1 // loop_footer
      %s15 = sadd.s32 1, %s11
    $region7: #{shared_dropout.1} parent=1 // loop_footer_branch
      %10 = sbr.rel target = $region3
    $region8: #{shared_dropout.1} parent=1 // loop_exit
      _
    %237 = vsyncpa [#allocation3], 1
    %s238 = scalar_lea.sflag [#allocation3], 1
    %239 = vsyncpa %s238, 1

</llo_original>
